<compile_context>
chip_gen: v7x
topology: tpu7x:2x2x1
jax: 0.10.0
libtpu: 0.0.40
codegen_flags: <defaults>
</compile_context>

<pallas_src>
import functools

import jax
import jax.numpy as jnp
from jax.experimental import pallas as pl
from jax.experimental.pallas import tpu as pltpu


# ---------------------------------------------------------------------------
# Kernels
# ---------------------------------------------------------------------------

def _ca_fused_kernel(x_ref, w1_ref, b1_ref, w2_ref, b2_ref, o_ref, *, inv_hw):
    """Single pass: pool + squeeze-excite + scale on one (B, C, HW) block."""
    x = x_ref[...]                                                # (B, C, HW) native dtype

    # AdaptiveAvgPool2d(1): f32 accumulation only on the reduction (Mosaic masks
    # the physically padded tail lanes when HW is not a multiple of 128).
    y = jnp.sum(x, axis=-1, dtype=jnp.float32) * inv_hw           # (B, C) f32

    # Conv1x1 -> ReLU -> Conv1x1 -> Sigmoid, batched over B on the MXU.
    h = jnp.dot(y, w1_ref[...], preferred_element_type=jnp.float32) + b1_ref[...]
    h = jnp.maximum(h, 0.0)                                       # (B, Cr)
    s = jnp.dot(h, w2_ref[...], preferred_element_type=jnp.float32) + b2_ref[...]
    s = jax.nn.sigmoid(s)                                         # (B, C)

    # x * y: broadcast per-channel scale over spatial positions, native dtype.
    o_ref[...] = (x * s.astype(x.dtype)[:, :, None]).astype(o_ref.dtype)


def _ca_pool_se_kernel(x_ref, w1_ref, b1_ref, w2_ref, b2_ref, s_ref, acc_ref,
                       *, hw, hw_tile, inv_hw):
    """Two-phase pass 1: accumulate the spatial sum over HW tiles, then run the
    squeeze-excite path on the last tile and emit the (1, C, 1) scale."""
    h_idx = pl.program_id(1)

    @pl.when(h_idx == 0)
    def _():
        acc_ref[...] = jnp.zeros_like(acc_ref)

    x = x_ref[...]                                                # (1, C, HW_TILE)
    lane = jax.lax.broadcasted_iota(jnp.int32, x.shape, 2)
    valid = (h_idx * hw_tile + lane) < hw                         # mask partial last tile
    acc_ref[...] += jnp.sum(jnp.where(valid, x, jnp.zeros_like(x)),
                            axis=-1, dtype=jnp.float32)           # (1, C) f32

    @pl.when(h_idx == pl.num_programs(1) - 1)
    def _():
        y = acc_ref[...] * inv_hw                                 # (1, C) f32
        hid = jnp.maximum(
            jnp.dot(y, w1_ref[...], preferred_element_type=jnp.float32) + b1_ref[...],
            0.0)
        s = jax.nn.sigmoid(
            jnp.dot(hid, w2_ref[...], preferred_element_type=jnp.float32) + b2_ref[...])
        s_ref[...] = s[:, :, None]                                # (1, C, 1) f32


def _ca_scale_kernel(x_ref, s_ref, o_ref):
    """Two-phase pass 2: out = x * scale, per (1, C, HW_TILE) block."""
    scale = s_ref[...].astype(x_ref.dtype)                        # (1, C, 1)
    o_ref[...] = (x_ref[...] * scale).astype(o_ref.dtype)


# ---------------------------------------------------------------------------
# Tiling / VMEM heuristics
# ---------------------------------------------------------------------------

def _vmem_limit_bytes():
    """Generation-aware scoped-VMEM target (v5e/v6e: 128 MiB, v7x: 64 MiB/TC)."""
    try:
        cap = int(pltpu.get_tpu_info().vmem_capacity_bytes)
    except Exception:
        cap = 64 << 20  # conservative fallback = v7x per-TC VMEM
    # Leave headroom for the compiler; never request anywhere near physical cap.
    return max(32 << 20, min((cap * 3) // 4, 100 << 20))


def _choose_batch_tile(n, per_elem_bytes, budget_bytes, target_steps=8,
                       min_block_bytes=2 << 20):
    """Batch tile: as large as the VMEM budget allows, but small enough to give
    >= target_steps grid steps (pipeline overlap + v7x dual-TC) as long as that
    does not shrink blocks below ~min_block_bytes."""
    per_elem_bytes = max(per_elem_bytes, 1)
    by_budget = max(1, min(n, budget_bytes // per_elem_bytes))
    by_steps = -(-n // target_steps)                       # ceil(n / target_steps)
    by_floor = -(-min_block_bytes // per_elem_bytes)       # keep blocks >= ~2 MiB
    return max(1, min(by_budget, max(by_steps, by_floor)))


def _choose_hw_tile(hw, c, itemsize, budget_bytes):
    """HW tile for the two-phase path: multiple of 128, block fits the budget."""
    per_lane_bytes = max(c * itemsize, 1)
    t = (budget_bytes // per_lane_bytes) // 128 * 128
    hw_ceil = -(-hw // 128) * 128
    return max(128, min(t, hw_ceil))


# ---------------------------------------------------------------------------
# Wrapper
# ---------------------------------------------------------------------------

def ca_layer(x, w1, b1, w2, b2, *, max_batch_tile=None, max_hw_tile=None,
             force_two_phase=False):
    """x: (N, C, H, W); w1: (C, Cr); b1: (1, Cr); w2: (Cr, C); b2: (1, C)."""
    N, C, H, W = x.shape
    HW = H * W
    Cr = w1.shape[1]
    itemsize = jnp.dtype(x.dtype).itemsize
    inv_hw = float(1.0 / HW)

    # No padding / slicing of HW: reshape is free, blocks handle the tail lanes.
    x_flat = x.reshape(N, C, HW)

    vmem_limit = _vmem_limit_bytes()
    weight_bytes = 2 * (C * Cr + Cr * C + Cr + C) * 4
    # double-buffered input + double-buffered output share the scoped VMEM.
    block_budget = max(2 << 20, (vmem_limit - weight_bytes - (4 << 20)) // 4)

    per_elem_bytes = C * HW * itemsize
    two_phase = force_two_phase or per_elem_bytes > block_budget

    if not two_phase:
        # ------------------------- fused single-pass path -------------------
        B_TILE = _choose_batch_tile(N, per_elem_bytes, block_budget)
        if max_batch_tile is not None:
            B_TILE = max(1, min(B_TILE, max_batch_tile))
        grid_n = pl.cdiv(N, B_TILE)                   # partial last block is fine

        cost = pl.CostEstimate(
            flops=2 * N * C * HW + 4 * N * C * Cr,    # pool-sum + scale-mul + 2 tiny matmuls
            transcendentals=N * C,                    # sigmoid
            bytes_accessed=2 * N * C * HW * itemsize + weight_bytes // 2,
        )

        out_flat = pl.pallas_call(
            functools.partial(_ca_fused_kernel, inv_hw=inv_hw),
            out_shape=jax.ShapeDtypeStruct((N, C, HW), x.dtype),
            grid_spec=pltpu.PrefetchScalarGridSpec(
                num_scalar_prefetch=0,
                grid=(grid_n,),
                in_specs=[
                    pl.BlockSpec((B_TILE, C, HW), lambda n: (n, 0, 0)),
                    pl.BlockSpec((C, Cr), lambda n: (0, 0)),
                    pl.BlockSpec((1, Cr), lambda n: (0, 0)),
                    pl.BlockSpec((Cr, C), lambda n: (0, 0)),
                    pl.BlockSpec((1, C), lambda n: (0, 0)),
                ],
                out_specs=pl.BlockSpec((B_TILE, C, HW), lambda n: (n, 0, 0)),
            ),
            compiler_params=pltpu.CompilerParams(
                dimension_semantics=("parallel",),
                vmem_limit_bytes=vmem_limit),
            cost_estimate=cost,
        )(x_flat, w1, b1, w2, b2)
        return out_flat.reshape(N, C, H, W)

    # ----------------------- two-phase HW-tiled path ------------------------
    # One batch element's (C, HW) slab does not fit the block budget (most
    # likely on v7x's 64 MiB VMEM): pool over HW tiles, then scale per HW tile.
    hw_tile = _choose_hw_tile(HW, C, itemsize, block_budget)
    if max_hw_tile is not None:
        hw_tile = max(128, min(hw_tile, max_hw_tile))
    n_hw = pl.cdiv(HW, hw_tile)

    # Pass 1: pooled mean + squeeze-excite -> per-channel scale (N, C, 1) f32.
    scale = pl.pallas_call(
        functools.partial(_ca_pool_se_kernel, hw=HW, hw_tile=hw_tile, inv_hw=inv_hw),
        out_shape=jax.ShapeDtypeStruct((N, C, 1), jnp.float32),
        grid_spec=pltpu.PrefetchScalarGridSpec(
            num_scalar_prefetch=0,
            grid=(N, n_hw),
            in_specs=[
                pl.BlockSpec((1, C, hw_tile), lambda n, h: (n, 0, h)),
                pl.BlockSpec((C, Cr), lambda n, h: (0, 0)),
                pl.BlockSpec((1, Cr), lambda n, h: (0, 0)),
                pl.BlockSpec((Cr, C), lambda n, h: (0, 0)),
                pl.BlockSpec((1, C), lambda n, h: (0, 0)),
            ],
            out_specs=pl.BlockSpec((1, C, 1), lambda n, h: (n, 0, 0)),
            scratch_shapes=[pltpu.VMEM((1, C), jnp.float32)],
        ),
        compiler_params=pltpu.CompilerParams(
            dimension_semantics=("parallel", "arbitrary"),
            vmem_limit_bytes=vmem_limit),
    )(x_flat, w1, b1, w2, b2)

    # Pass 2: out = x * scale, tiled over HW.
    out_flat = pl.pallas_call(
        _ca_scale_kernel,
        out_shape=jax.ShapeDtypeStruct((N, C, HW), x.dtype),
        grid_spec=pltpu.PrefetchScalarGridSpec(
            num_scalar_prefetch=0,
            grid=(N, n_hw),
            in_specs=[
                pl.BlockSpec((1, C, hw_tile), lambda n, h: (n, 0, h)),
                pl.BlockSpec((1, C, 1), lambda n, h: (n, 0, 0)),
            ],
            out_specs=pl.BlockSpec((1, C, hw_tile), lambda n, h: (n, 0, h)),
        ),
        compiler_params=pltpu.CompilerParams(
            dimension_semantics=("parallel", "parallel"),
            vmem_limit_bytes=vmem_limit),
    )(x_flat, scale)
    return out_flat.reshape(N, C, H, W)


# ---------------------------------------------------------------------------
# Params / reference
# ---------------------------------------------------------------------------

def init_params(key, channel, reduction=16, dtype=jnp.float32):
    """Deterministic synthetic params matching CALayer.__init__ shapes.

    PyTorch conv weights are (out, in, 1, 1); we store them transposed as
    (in, out) matmul operands for the kernel.
    """
    cr = channel // reduction
    k1, k2, k3, k4 = jax.random.split(key, 4)
    w1 = jax.random.normal(k1, (cr, channel), dtype) * 0.1    # conv1 weight (out, in)
    b1 = jax.random.normal(k2, (cr,), dtype) * 0.1
    w2 = jax.random.normal(k3, (channel, cr), dtype) * 0.1    # conv2 weight (out, in)
    b2 = jax.random.normal(k4, (channel,), dtype) * 0.1
    # reshape for the kernel: y(B,C) @ w1.T(C,Cr); h(B,Cr) @ w2.T(Cr,C)
    return w1.T, b1.reshape(1, cr), w2.T, b2.reshape(1, channel)


def ca_layer_ref(x, w1, b1, w2, b2):
    """Pure-JAX reference with identical semantics."""
    y = jnp.mean(x, axis=(2, 3))                              # (N, C)
    h = jnp.maximum(y @ w1 + b1, 0.0)                         # (N, Cr)
    s = jax.nn.sigmoid(h @ w2 + b2)                           # (N, C)
    return x * s[:, :, None, None]


if __name__ == "__main__":
    key = jax.random.PRNGKey(0)
    kx, kp = jax.random.split(key)

    # Main check: fused single-pass path, HW a multiple of 128.
    N, C, H, W = 2, 32, 16, 16          # channel=32, reduction=16 -> hidden=2
    x = jax.random.normal(kx, (N, C, H, W), jnp.float32)
    w1, b1, w2, b2 = init_params(kp, C, reduction=16)
    out = jax.block_until_ready(ca_layer(x, w1, b1, w2, b2))
    ref = ca_layer_ref(x, w1, b1, w2, b2)
    assert out.shape == (N, C, H, W)
    assert jnp.allclose(out, ref, atol=1e-5, rtol=1e-5), "fused path mismatch"

    # Fused path with HW % 128 != 0 (no wrapper pad) and a partial batch block.
    x2 = jax.random.normal(kx, (3, C, 10, 10), jnp.float32)
    out2 = jax.block_until_ready(ca_layer(x2, w1, b1, w2, b2, max_batch_tile=2))
    ref2 = ca_layer_ref(x2, w1, b1, w2, b2)
    assert jnp.allclose(out2, ref2, atol=1e-5, rtol=1e-5), "unaligned-HW mismatch"

    # Two-phase HW-tiled fallback (forced at small shapes; 4 tiles, last partial).
    x3 = jax.random.normal(kx, (2, C, 20, 20), jnp.float32)
    out3 = jax.block_until_ready(
        ca_layer(x3, w1, b1, w2, b2, force_two_phase=True, max_hw_tile=128))
    ref3 = ca_layer_ref(x3, w1, b1, w2, b2)
    assert jnp.allclose(out3, ref3, atol=1e-5, rtol=1e-5), "two-phase mismatch"

    print("KERNEL_OK")
</pallas_src>

<mosaic_0001>
module attributes {stable_mosaic.version = 11 : i64} {
  func.func @_ca_fused_kernel(%arg0: i32, %arg1: memref<2x32x256xf32, #tpu.memory_space<vmem>>, %arg2: memref<32x2xf32, #tpu.memory_space<vmem>>, %arg3: memref<1x2xf32, #tpu.memory_space<vmem>>, %arg4: memref<2x32xf32, #tpu.memory_space<vmem>>, %arg5: memref<1x32xf32, #tpu.memory_space<vmem>>, %arg6: memref<2x32x256xf32, #tpu.memory_space<vmem>>) attributes {dimension_semantics = [#tpu.dimension_semantics<parallel>], iteration_bounds = array<i64: 1>, scalar_prefetch = 0 : i64, scratch_operands = 0 : i64, tpu.core_type = #tpu.core_type<tc>, window_params = [{transform_indices = @transform_0, window_bounds = array<i64: 2, 32, 256>}, {pipeline_mode = #tpu.pipeline_mode<synchronous>, transform_indices = @transform_1, window_bounds = array<i64: 32, 2>}, {pipeline_mode = #tpu.pipeline_mode<synchronous>, transform_indices = @transform_2, window_bounds = array<i64: 1, 2>}, {pipeline_mode = #tpu.pipeline_mode<synchronous>, transform_indices = @transform_3, window_bounds = array<i64: 2, 32>}, {pipeline_mode = #tpu.pipeline_mode<synchronous>, transform_indices = @transform_4, window_bounds = array<i64: 1, 32>}, {transform_indices = @transform_5, window_bounds = array<i64: 2, 32, 256>}]} {
    %c0 = arith.constant 0 : index
    %c0_0 = arith.constant 0 : index
    %c0_1 = arith.constant 0 : index
    %0 = vector.load %arg1[%c0, %c0_0, %c0_1] : memref<2x32x256xf32, #tpu.memory_space<vmem>>, vector<2x32x256xf32>
    %cst = arith.constant dense<0.000000e+00> : vector<2x32xf32>
    %1 = vector.multi_reduction <add>, %0, %cst [2] : vector<2x32x256xf32> to vector<2x32xf32>
    %cst_2 = arith.constant 3.906250e-03 : f32
    %2 = vector.broadcast %cst_2 : f32 to vector<2x32xf32>
    %3 = arith.mulf %1, %2 : vector<2x32xf32>
    %c0_3 = arith.constant 0 : index
    %c0_4 = arith.constant 0 : index
    %4 = vector.load %arg2[%c0_3, %c0_4] : memref<32x2xf32, #tpu.memory_space<vmem>>, vector<32x2xf32>
    %cst_5 = arith.constant dense<0.000000e+00> : vector<2x2xf32>
    %5 = tpu.matmul %3, %4, %cst_5 {dimension_numbers = #tpu.dot_dimension_numbers<[1], [0], [0], [1], [0, 0, 1, 1], [], []>} : vector<2x32xf32>, vector<32x2xf32>, vector<2x2xf32> -> vector<2x2xf32>
    %c0_6 = arith.constant 0 : index
    %c0_7 = arith.constant 0 : index
    %6 = vector.load %arg3[%c0_6, %c0_7] : memref<1x2xf32, #tpu.memory_space<vmem>>, vector<1x2xf32>
    %7 = vector.broadcast %6 : vector<1x2xf32> to vector<2x2xf32>
    %8 = arith.addf %5, %7 : vector<2x2xf32>
    %cst_8 = arith.constant 0.000000e+00 : f32
    %9 = vector.broadcast %cst_8 : f32 to vector<2x2xf32>
    %10 = arith.maximumf %8, %9 : vector<2x2xf32>
    %c0_9 = arith.constant 0 : index
    %c0_10 = arith.constant 0 : index
    %11 = vector.load %arg4[%c0_9, %c0_10] : memref<2x32xf32, #tpu.memory_space<vmem>>, vector<2x32xf32>
    %cst_11 = arith.constant dense<0.000000e+00> : vector<2x32xf32>
    %12 = tpu.matmul %10, %11, %cst_11 {dimension_numbers = #tpu.dot_dimension_numbers<[1], [0], [0], [1], [0, 0, 1, 1], [], []>} : vector<2x2xf32>, vector<2x32xf32>, vector<2x32xf32> -> vector<2x32xf32>
    %c0_12 = arith.constant 0 : index
    %c0_13 = arith.constant 0 : index
    %13 = vector.load %arg5[%c0_12, %c0_13] : memref<1x32xf32, #tpu.memory_space<vmem>>, vector<1x32xf32>
    %14 = vector.broadcast %13 : vector<1x32xf32> to vector<2x32xf32>
    %15 = arith.addf %12, %14 : vector<2x32xf32>
    %16 = arith.negf %15 : vector<2x32xf32>
    %17 = math.exp %16 : vector<2x32xf32>
    %cst_14 = arith.constant 1.000000e+00 : f32
    %18 = vector.broadcast %cst_14 : f32 to vector<2x32xf32>
    %19 = arith.addf %18, %17 : vector<2x32xf32>
    %20 = arith.divf %18, %19 : vector<2x32xf32>
    %21 = vector.shape_cast %20 : vector<2x32xf32> to vector<2x32x1xf32>
    %22 = vector.broadcast %21 : vector<2x32x1xf32> to vector<2x32x256xf32>
    %23 = arith.mulf %0, %22 : vector<2x32x256xf32>
    %c0_15 = arith.constant 0 : index
    %c0_16 = arith.constant 0 : index
    %c0_17 = arith.constant 0 : index
    %24 = vector.load %arg6[%c0_15, %c0_16, %c0_17] : memref<2x32x256xf32, #tpu.memory_space<vmem>>, vector<2x32x256xf32>
    tpu.vector_store %arg6[%c0_15, %c0_16, %c0_17], %23 {strides = array<i32>} : memref<2x32x256xf32, #tpu.memory_space<vmem>>, vector<2x32x256xf32>,
    return
  }
  func.func @transform_0(%arg0: i32) -> (i32, i32, i32) {
    %c0_i32 = arith.constant 0 : i32
    %c0_i32_0 = arith.constant 0 : i32
    %c0_i32_1 = arith.constant 0 : i32
    return %arg0, %c0_i32, %c0_i32_0 : i32, i32, i32
  }
  func.func @transform_1(%arg0: i32) -> (i32, i32) {
    %c0_i32 = arith.constant 0 : i32
    %c0_i32_0 = arith.constant 0 : i32
    %c0_i32_1 = arith.constant 0 : i32
    return %c0_i32, %c0_i32_0 : i32, i32
  }
  func.func @transform_2(%arg0: i32) -> (i32, i32) {
    %c0_i32 = arith.constant 0 : i32
    %c0_i32_0 = arith.constant 0 : i32
    %c0_i32_1 = arith.constant 0 : i32
    return %c0_i32, %c0_i32_0 : i32, i32
  }
  func.func @transform_3(%arg0: i32) -> (i32, i32) {
    %c0_i32 = arith.constant 0 : i32
    %c0_i32_0 = arith.constant 0 : i32
    %c0_i32_1 = arith.constant 0 : i32
    return %c0_i32, %c0_i32_0 : i32, i32
  }
  func.func @transform_4(%arg0: i32) -> (i32, i32) {
    %c0_i32 = arith.constant 0 : i32
    %c0_i32_0 = arith.constant 0 : i32
    %c0_i32_1 = arith.constant 0 : i32
    return %c0_i32, %c0_i32_0 : i32, i32
  }
  func.func @transform_5(%arg0: i32) -> (i32, i32, i32) {
    %c0_i32 = arith.constant 0 : i32
    %c0_i32_0 = arith.constant 0 : i32
    %c0_i32_1 = arith.constant 0 : i32
    return %arg0, %c0_i32, %c0_i32_0 : i32, i32, i32
  }
}

</mosaic_0001>

<llo_original>
// kernel: tpu_custom_call.1
$region0: #{tpu_custom_call.1}
  #allocation0 [shape = 'u32[]', space=smem, size = 0x4, offset = 0x4, fixed_abs, tag = 'smem constant byte address 0x4 - core index']
  #allocation1 [shape = 'u32[144,128]{1,0:T(1,128)}', space=vmem, size = 0x12000, scoped, tag = 'internal scratch']
  %s0 = inlined_call_operand.hbm [shape: f32[2,32,256], index: 0, kind: input, shape index: {}]
  %s1 = inlined_call_operand.vmem [shape: f32[32,2], index: 1, kind: input, shape index: {}]
  %s2 = inlined_call_operand.vmem [shape: f32[1,2], index: 2, kind: input, shape index: {}]
  %s3 = inlined_call_operand.vmem [shape: f32[2,32], index: 3, kind: input, shape index: {}]
  %s4 = inlined_call_operand.vmem [shape: f32[1,32], index: 4, kind: input, shape index: {}]
  %s5 = inlined_call_operand.hbm [shape: f32[2,32,256], index: 5, kind: output, shape index: {}]
  %s6 = sld [smem:[#allocation0]]
  $region34: #{tpu_custom_call.1} parent=0
    _
  %s8 = ssub.s32 1, %s6
  %s9 = scalar_select 0, %s8, %s6
  $region1: #{tpu_custom_call.1} parent=0
    #allocation2 [shape = 'u8[65536]{0}', space=vmem, size = 0x10000, scoped, tag = 'input window, operand 0, single buffered']
    #allocation3 [shape = 's32[1]{0}', space=sflag, size = 0x4, scoped, tag = 'scoped memory for tpu_custom_call.1']
    #allocation4 [shape = 's32[1]{0}', space=sflag, size = 0x4, scoped, tag = 'scoped memory for tpu_custom_call.1']
    #allocation5 [shape = 'u8[65536]{0}', space=vmem, size = 0x10000, scoped, tag = 'output window, operand 0, single buffered']
    %10 = vsyncpa [#allocation3], 0
    %11 = vsyncpa [#allocation4], 0
    // Predicated region
    $region2: #{tpu_custom_call.1} parent=1 // pred_check
      _
    $region3: #{tpu_custom_call.1} parent=1 // pred_check_branch
      %13 = sbr.rel (0) target = $region5
    $region4: #{tpu_custom_call.1} parent=1 // pred_region
      %s15 = ssub.s32 2048, 2048
      %16 = vsyncadd [#allocation3], %s15
      %s17 = sshll.u32 [#allocation2], 4
      %s18 = int_to_ptr.vmem [resolvable:$true] %s17
      %23 = dma.hbm_to_vmem [thread:$0]  %s0, 2048, %s18, [#allocation3], 256, 256, 16
    $region5: #{tpu_custom_call.1} parent=1 // pred_fallthru
      _
    // Predicated region
    $region6: #{tpu_custom_call.1} parent=1 // pred_check
      _
    $region7: #{tpu_custom_call.1} parent=1 // pred_check_branch
      %25 = sbr.rel (0) target = $region9
    $region8: #{tpu_custom_call.1} parent=1 // pred_region
      _
    $region9: #{tpu_custom_call.1} parent=1 // pred_fallthru
      _
    // Predicated region
    $region10: #{tpu_custom_call.1} parent=1 // pred_check
      _
    $region11: #{tpu_custom_call.1} parent=1 // pred_check_branch
      %27 = sbr.rel (0) target = $region13
    $region12: #{tpu_custom_call.1} parent=1 // pred_region
      _
    $region13: #{tpu_custom_call.1} parent=1 // pred_fallthru
      _
    // Predicated region
    $region14: #{tpu_custom_call.1} parent=1 // pred_check
      _
    $region15: #{tpu_custom_call.1} parent=1 // pred_check_branch
      %29 = sbr.rel (0) target = $region17
    $region16: #{tpu_custom_call.1} parent=1 // pred_region
      _
    $region17: #{tpu_custom_call.1} parent=1 // pred_fallthru
      _
    // Predicated region
    $region18: #{tpu_custom_call.1} parent=1 // pred_check
      _
    $region19: #{tpu_custom_call.1} parent=1 // pred_check_branch
      %31 = sbr.rel (0) target = $region21
    $region20: #{tpu_custom_call.1} parent=1 // pred_region
      _
    $region21: #{tpu_custom_call.1} parent=1 // pred_fallthru
      _
    // Predicated region
    $region22: #{tpu_custom_call.1} parent=1 // pred_check
      _
    $region23: #{tpu_custom_call.1} parent=1 // pred_check_branch
      %33 = sbr.rel (0) target = $region25
    $region24: #{tpu_custom_call.1} parent=1 // pred_region
      %34 = dma.done [#allocation3], 2048
    $region25: #{tpu_custom_call.1} parent=1 // pred_fallthru
      _
    %v35 = vld [vmem:[#allocation2] sm:$0xff]
    %v36 = vld [vmem:[#allocation2 + $0x8] sm:$0xff]
    %v37 = vld [vmem:[#allocation2 + $0x10] sm:$0xff]
    %v38 = vld [vmem:[#allocation2 + $0x18] sm:$0xff]
    %v39 = vld [vmem:[#allocation2 + $0x20] sm:$0xff]
    %v40 = vld [vmem:[#allocation2 + $0x28] sm:$0xff]
    %v41 = vld [vmem:[#allocation2 + $0x30] sm:$0xff]
    %v42 = vld [vmem:[#allocation2 + $0x38] sm:$0xff]
    %v43 = vld [vmem:[#allocation2 + $0x40] sm:$0xff]
    %v44 = vld [vmem:[#allocation2 + $0x48] sm:$0xff]
    %v45 = vld [vmem:[#allocation2 + $0x50] sm:$0xff]
    %v46 = vld [vmem:[#allocation2 + $0x58] sm:$0xff]
    %v47 = vld [vmem:[#allocation2 + $0x60] sm:$0xff]
    %v48 = vld [vmem:[#allocation2 + $0x68] sm:$0xff]
    %v49 = vld [vmem:[#allocation2 + $0x70] sm:$0xff]
    %v50 = vld [vmem:[#allocation2 + $0x78] sm:$0xff]
    %v51 = vadd.f32 %v35, %v36
    %52 = vadd.xlane.f32.xlu0 %v51
    %v53 = vpop.xlane.xlu0 %52
    %v54 = vadd.f32 %v37, %v38
    %55 = vadd.xlane.f32.xlu0 %v54
    %v56 = vpop.xlane.xlu0 %55
    %v57 = vadd.f32 %v39, %v40
    %58 = vadd.xlane.f32.xlu0 %v57
    %v59 = vpop.xlane.xlu0 %58
    %v60 = vadd.f32 %v41, %v42
    %61 = vadd.xlane.f32.xlu0 %v60
    %v62 = vpop.xlane.xlu0 %61
    %v63 = vadd.f32 %v43, %v44
    %64 = vadd.xlane.f32.xlu0 %v63
    %v65 = vpop.xlane.xlu0 %64
    %v66 = vadd.f32 %v45, %v46
    %67 = vadd.xlane.f32.xlu0 %v66
    %v68 = vpop.xlane.xlu0 %67
    %v69 = vadd.f32 %v47, %v48
    %70 = vadd.xlane.f32.xlu0 %v69
    %v71 = vpop.xlane.xlu0 %70
    %v72 = vadd.f32 %v49, %v50
    %73 = vadd.xlane.f32.xlu0 %v72
    %v74 = vpop.xlane.xlu0 %73
    %v75 = vmul.f32 %v53, 0.00390625
    %v76 = vmul.f32 %v56, 0.00390625
    %v77 = vmul.f32 %v59, 0.00390625
    %v78 = vmul.f32 %v62, 0.00390625
    %v79 = vmul.f32 %v65, 0.00390625
    %v80 = vmul.f32 %v68, 0.00390625
    %v81 = vmul.f32 %v71, 0.00390625
    %v82 = vmul.f32 %v74, 0.00390625
    %v83 = vld [vmem:[%s1] sm:$0xff]
    %v84 = vld [vmem:[%s1 + $0x8] sm:$0xff]
    %v85 = vld [vmem:[%s1 + $0x10] sm:$0xff]
    %v86 = vld [vmem:[%s1 + $0x18] sm:$0xff]
    %v87 = vld [vmem:[%s2] sm:$0x1]
    %v89 = vlaneseq
    %v90 = vshrl.u32 %v89, 7
    %v91 = vsub.s32 0, %v90
    %v92 = vrot.slane %v87, %v91
    %v102 = vlaneseq
    %v103 = vand.u32 %v102, 127
    %v104 = vlaneseq
    %v105 = vshrl.u32 %v104, 7
    %v106 = vsub.s32 %v103, %v105
    %v107 = vrot.slane %v75, %v106
    %v108 = vadd.s32 %v103, 4294967288
    %v109 = vlaneseq
    %v110 = vshrl.u32 %v109, 7
    %v111 = vsub.s32 %v108, %v110
    %v112 = vrot.slane %v76, %v111
    %vm113 = vcmask 130112
    %v114 = vsel %vm113, %v112, %v107
    %v115 = vadd.s32 %v103, 4294967280
    %v116 = vlaneseq
    %v117 = vshrl.u32 %v116, 7
    %v118 = vsub.s32 %v115, %v117
    %v119 = vrot.slane %v77, %v118
    %vm120 = vcmask 195712
    %v121 = vsel %vm120, %v119, %v114
    %v122 = vadd.s32 %v103, 4294967272
    %v123 = vlaneseq
    %v124 = vshrl.u32 %v123, 7
    %v125 = vsub.s32 %v122, %v124
    %v126 = vrot.slane %v78, %v125
    %vm127 = vcmask 261312
    %v128 = vsel %vm127, %v126, %v121
    %v129 = vlaneseq
    %v130 = vshrl.u32 %v129, 7
    %v131 = vsub.s32 %v103, %v130
    %v132 = vrot.slane %v79, %v131
    %v133 = vlaneseq
    %v134 = vshrl.u32 %v133, 7
    %v135 = vsub.s32 %v108, %v134
    %v136 = vrot.slane %v80, %v135
    %v137 = vsel %vm113, %v136, %v132
    %v138 = vlaneseq
    %v139 = vshrl.u32 %v138, 7
    %v140 = vsub.s32 %v115, %v139
    %v141 = vrot.slane %v81, %v140
    %v142 = vsel %vm120, %v141, %v137
    %v143 = vlaneseq
    %v144 = vshrl.u32 %v143, 7
    %v145 = vsub.s32 %v122, %v144
    %v146 = vrot.slane %v82, %v145
    %v147 = vsel %vm127, %v146, %v142
    %vm148 = vcmask 1041409
    %v149 = vsel %vm148, %v147, %v128
    %vm150 = vcmask 261120
    %v151 = vsel %vm150, %v149, 0
    %153 = vmatprep.subr.mxu0 0.0
    %154 = vmatpush1.msra.mxu0 %v83
    %155 = vmatprep.subr.mxu0 0.0
    %156 = vmatpush1.msra.mxu0 %v84
    %157 = vmatprep.subr.mxu0 0.0
    %158 = vmatpush1.msra.mxu0 %v85
    %159 = vmatprep.subr.mxu0 0.0
    %160 = vmatpush1.msra.mxu0 %v86
    %161 = vmatprep.subr.mxu0 0.0
    %162 = vmatpush1.msra.mxu0 0.0
    %163 = vmatprep.subr.mxu0 0.0
    %164 = vmatpush1.msra.mxu0 0.0
    %165 = vmatprep.subr.mxu0 0.0
    %166 = vmatpush1.msra.mxu0 0.0
    %167 = vmatprep.subr.mxu0 0.0
    %168 = vmatpush1.msra.mxu0 0.0
    %169 = vmatprep.subr.mxu0 0.0
    %170 = vmatpush1.msra.mxu0 0.0
    %171 = vmatprep.subr.mxu0 0.0
    %172 = vmatpush1.msra.mxu0 0.0
    %173 = vmatprep.subr.mxu0 0.0
    %174 = vmatpush1.msra.mxu0 0.0
    %175 = vmatprep.subr.mxu0 0.0
    %176 = vmatpush1.msra.mxu0 0.0
    %177 = vmatprep.subr.mxu0 0.0
    %178 = vmatpush1.msra.mxu0 0.0
    %179 = vmatprep.subr.mxu0 0.0
    %180 = vmatpush1.msra.mxu0 0.0
    %181 = vmatprep.subr.mxu0 0.0
    %182 = vmatpush1.msra.mxu0 0.0
    %183 = vmatprep.subr.mxu0 0.0
    %184 = vmatpush1.msra.mxu0 0.0
    %185 = vmatprep.subr.mxu0 0.0
    %186 = vmatpush1.msra.mxu0 0.0
    %187 = vmatprep.subr.mxu0 0.0
    %188 = vmatpush1.msra.mxu0 0.0
    %189 = vmatprep.subr.mxu0 0.0
    %190 = vmatpush1.msra.mxu0 0.0
    %191 = vmatprep.subr.mxu0 0.0
    %192 = vmatpush1.msra.mxu0 0.0
    %193 = vmatprep.subr.mxu0 0.0
    %194 = vmatpush1.msra.mxu0 0.0
    %195 = vmatprep.subr.mxu0 0.0
    %196 = vmatpush1.msra.mxu0 0.0
    %197 = vmatprep.subr.mxu0 0.0
    %198 = vmatpush1.msra.mxu0 0.0
    %199 = vmatprep.subr.mxu0 0.0
    %200 = vmatpush1.msra.mxu0 0.0
    %201 = vmatprep.subr.mxu0 0.0
    %202 = vmatpush1.msra.mxu0 0.0
    %203 = vmatprep.subr.mxu0 0.0
    %204 = vmatpush1.msra.mxu0 0.0
    %205 = vmatprep.subr.mxu0 0.0
    %206 = vmatpush1.msra.mxu0 0.0
    %207 = vmatprep.subr.mxu0 0.0
    %208 = vmatpush1.msra.mxu0 0.0
    %209 = vmatprep.subr.mxu0 0.0
    %210 = vmatpush1.msra.mxu0 0.0
    %211 = vmatprep.subr.mxu0 0.0
    %212 = vmatpush1.msra.mxu0 0.0
    %213 = vmatprep.subr.mxu0 0.0
    %214 = vmatpush1.msra.mxu0 0.0
    %215 = vmatprep.subr.mxu0 0.0
    %216 = vmatpush1.msra.mxu0 0.0
    %217 = vmatprep.mubr.f32.mxu0 0.0
    %218 = vmatmul.mubr.f32.gmra.mrb[0].mxu0 %v151
    %v219 = vpop.f32.mrb[0].mxu0
    %v220 = vadd.f32 %v92, %v219
    %v221 = vpop.f32.mrb[0].mxu0
    %222 = vdwg.mxu0
    %v223 = vmax.f32 %v220, 0.0
    %v224 = vld [vmem:[%s3] sm:$0x3]
    %v225 = vld [vmem:[%s4] sm:$0x1]
    %v227 = vlaneseq
    %v228 = vshrl.u32 %v227, 7
    %v229 = vsub.s32 0, %v228
    %v230 = vrot.slane %v225, %v229
    %vm232 = vcmask 15360
    %v234 = vsel %vm232, %v223, 0
    %vm236 = vcmask 1041408
    %v238 = vsel %vm236, %v224, 0
    %240 = vmatprep.subr.mxu0 0.0
    %241 = vmatpush1.msra.mxu0 %v238
    %242 = vmatprep.subr.mxu0 0.0
    %243 = vmatpush1.msra.mxu0 0.0
    %244 = vmatprep.subr.mxu0 0.0
    %245 = vmatpush1.msra.mxu0 0.0
    %246 = vmatprep.subr.mxu0 0.0
    %247 = vmatpush1.msra.mxu0 0.0
    %248 = vmatprep.subr.mxu0 0.0
    %249 = vmatpush1.msra.mxu0 0.0
    %250 = vmatprep.subr.mxu0 0.0
    %251 = vmatpush1.msra.mxu0 0.0
    %252 = vmatprep.subr.mxu0 0.0
    %253 = vmatpush1.msra.mxu0 0.0
    %254 = vmatprep.subr.mxu0 0.0
    %255 = vmatpush1.msra.mxu0 0.0
    %256 = vmatprep.subr.mxu0 0.0
    %257 = vmatpush1.msra.mxu0 0.0
    %258 = vmatprep.subr.mxu0 0.0
    %259 = vmatpush1.msra.mxu0 0.0
    %260 = vmatprep.subr.mxu0 0.0
    %261 = vmatpush1.msra.mxu0 0.0
    %262 = vmatprep.subr.mxu0 0.0
    %263 = vmatpush1.msra.mxu0 0.0
    %264 = vmatprep.subr.mxu0 0.0
    %265 = vmatpush1.msra.mxu0 0.0
    %266 = vmatprep.subr.mxu0 0.0
    %267 = vmatpush1.msra.mxu0 0.0
    %268 = vmatprep.subr.mxu0 0.0
    %269 = vmatpush1.msra.mxu0 0.0
    %270 = vmatprep.subr.mxu0 0.0
    %271 = vmatpush1.msra.mxu0 0.0
    %272 = vmatprep.subr.mxu0 0.0
    %273 = vmatpush1.msra.mxu0 0.0
    %274 = vmatprep.subr.mxu0 0.0
    %275 = vmatpush1.msra.mxu0 0.0
    %276 = vmatprep.subr.mxu0 0.0
    %277 = vmatpush1.msra.mxu0 0.0
    %278 = vmatprep.subr.mxu0 0.0
    %279 = vmatpush1.msra.mxu0 0.0
    %280 = vmatprep.subr.mxu0 0.0
    %281 = vmatpush1.msra.mxu0 0.0
    %282 = vmatprep.subr.mxu0 0.0
    %283 = vmatpush1.msra.mxu0 0.0
    %284 = vmatprep.subr.mxu0 0.0
    %285 = vmatpush1.msra.mxu0 0.0
    %286 = vmatprep.subr.mxu0 0.0
    %287 = vmatpush1.msra.mxu0 0.0
    %288 = vmatprep.subr.mxu0 0.0
    %289 = vmatpush1.msra.mxu0 0.0
    %290 = vmatprep.subr.mxu0 0.0
    %291 = vmatpush1.msra.mxu0 0.0
    %292 = vmatprep.subr.mxu0 0.0
    %293 = vmatpush1.msra.mxu0 0.0
    %294 = vmatprep.subr.mxu0 0.0
    %295 = vmatpush1.msra.mxu0 0.0
    %296 = vmatprep.subr.mxu0 0.0
    %297 = vmatpush1.msra.mxu0 0.0
    %298 = vmatprep.subr.mxu0 0.0
    %299 = vmatpush1.msra.mxu0 0.0
    %300 = vmatprep.subr.mxu0 0.0
    %301 = vmatpush1.msra.mxu0 0.0
    %302 = vmatprep.subr.mxu0 0.0
    %303 = vmatpush1.msra.mxu0 0.0
    %304 = vmatprep.mubr.f32.mxu0 0.0
    %305 = vmatmul.mubr.f32.gmra.mrb[0].mxu0 %v234
    %v306 = vpop.f32.mrb[0].mxu0
    %v307 = vadd.f32 %v230, %v306
    %v308 = vpop.f32.mrb[0].mxu0
    %309 = vdwg.mxu0
    %v310 = vxor.u32 %v307, 2147483648
    %v311 = vmul.f32 %v310, 1.442695
    %v312 = vpow.pop %v311
    %v313 = vadd.f32 %v312, 1.0
    %v314 = vrcp.pop %v313
    %v315 = vmul.f32 1.0, %v314
    %v316 = vlaneseq
    %v317 = vshrl.u32 %v316, 7
    %v318 = vsub.s32 0, %v317
    %v319 = vrot.slane %v315, %v318
    %321 = vbcast.lane.b32.xlu0 %v319, 256
    %v322 = vpop.permute.xlu0 %321
    %s324 = sor.u32 256, 8
    %325 = vbcast.lane.b32.xlu0 %v319, %s324
    %v326 = vpop.permute.xlu0 %325
    %s328 = sor.u32 256, 16
    %329 = vbcast.lane.b32.xlu0 %v319, %s328
    %v330 = vpop.permute.xlu0 %329
    %s332 = sor.u32 256, 24
    %333 = vbcast.lane.b32.xlu0 %v319, %s332
    %v334 = vpop.permute.xlu0 %333
    %v335 = vlaneseq
    %v336 = vshrl.u32 %v335, 7
    %v337 = vsub.s32 1, %v336
    %v338 = vrot.slane %v315, %v337
    %340 = vbcast.lane.b32.xlu0 %v338, 256
    %v341 = vpop.permute.xlu0 %340
    %s343 = sor.u32 256, 8
    %344 = vbcast.lane.b32.xlu0 %v338, %s343
    %v345 = vpop.permute.xlu0 %344
    %s347 = sor.u32 256, 16
    %348 = vbcast.lane.b32.xlu0 %v338, %s347
    %v349 = vpop.permute.xlu0 %348
    %s351 = sor.u32 256, 24
    %352 = vbcast.lane.b32.xlu0 %v338, %s351
    %v353 = vpop.permute.xlu0 %352
    %v354 = vmul.f32 %v35, %v322
    %v355 = vmul.f32 %v36, %v322
    %v356 = vmul.f32 %v37, %v326
    %v357 = vmul.f32 %v38, %v326
    %v358 = vmul.f32 %v39, %v330
    %v359 = vmul.f32 %v40, %v330
    %v360 = vmul.f32 %v41, %v334
    %v361 = vmul.f32 %v42, %v334
    %v362 = vmul.f32 %v43, %v341
    %v363 = vmul.f32 %v44, %v341
    %v364 = vmul.f32 %v45, %v345
    %v365 = vmul.f32 %v46, %v345
    %v366 = vmul.f32 %v47, %v349
    %v367 = vmul.f32 %v48, %v349
    %v368 = vmul.f32 %v49, %v353
    %v369 = vmul.f32 %v50, %v353
    %370 = vst [vmem:[#allocation5] sm:$0xff] %v354
    %371 = vst [vmem:[#allocation5 + $0x8] sm:$0xff] %v355
    %372 = vst [vmem:[#allocation5 + $0x10] sm:$0xff] %v356
    %373 = vst [vmem:[#allocation5 + $0x18] sm:$0xff] %v357
    %374 = vst [vmem:[#allocation5 + $0x20] sm:$0xff] %v358
    %375 = vst [vmem:[#allocation5 + $0x28] sm:$0xff] %v359
    %376 = vst [vmem:[#allocation5 + $0x30] sm:$0xff] %v360
    %377 = vst [vmem:[#allocation5 + $0x38] sm:$0xff] %v361
    %378 = vst [vmem:[#allocation5 + $0x40] sm:$0xff] %v362
    %379 = vst [vmem:[#allocation5 + $0x48] sm:$0xff] %v363
    %380 = vst [vmem:[#allocation5 + $0x50] sm:$0xff] %v364
    %381 = vst [vmem:[#allocation5 + $0x58] sm:$0xff] %v365
    %382 = vst [vmem:[#allocation5 + $0x60] sm:$0xff] %v366
    %383 = vst [vmem:[#allocation5 + $0x68] sm:$0xff] %v367
    %384 = vst [vmem:[#allocation5 + $0x70] sm:$0xff] %v368
    %385 = vst [vmem:[#allocation5 + $0x78] sm:$0xff] %v369
    // Predicated region
    $region26: #{tpu_custom_call.1} parent=1 // pred_check
      _
    $region27: #{tpu_custom_call.1} parent=1 // pred_check_branch
      %387 = sbr.rel (0) target = $region29
    $region28: #{tpu_custom_call.1} parent=1 // pred_region
      %s389 = ssub.s32 2048, 2048
      %390 = vsyncadd [#allocation4], %s389
      %s391 = sshll.u32 [#allocation5], 4
      %s392 = int_to_ptr.vmem [resolvable:$true] %s391
      %397 = dma.vmem_to_hbm [thread:$0]  %s392, 2048, %s5, [#allocation4], 256, 256, 16
    $region29: #{tpu_custom_call.1} parent=1 // pred_fallthru
      _
    // Predicated region
    $region30: #{tpu_custom_call.1} parent=1 // pred_check
      _
    $region31: #{tpu_custom_call.1} parent=1 // pred_check_branch
      %399 = sbr.rel (0) target = $region33
    $region32: #{tpu_custom_call.1} parent=1 // pred_region
      %400 = dma.done [#allocation4], 2048
    $region33: #{tpu_custom_call.1} parent=1 // pred_fallthru
      _
    %401 = vsyncpa [#allocation3], 1
    %402 = vsyncpa [#allocation4], 1

</llo_original>
